<compile_context>
chip_gen: v7x
topology: tpu7x:2x2x1
jax: 0.10.0
libtpu: 0.0.40
codegen_flags: <defaults>
</compile_context>

<pallas_src>
import functools

import jax
import jax.numpy as jnp
from jax.experimental import pallas as pl
from jax.experimental.pallas import tpu as pltpu

_SUB = 8            # sublane tile
_LANE = 128         # lane tile
_BLOCK_BYTES_BUDGET = 8 << 20   # both input blocks together, per pipeline buffer


def _dice_partials_kernel(logits_ref, labels_ref, out_ref,
                          t_acc, ty_acc, l_acc,
                          *, row_tile, rows, num_blocks, blocks_per_core):
    """Accumulates lane-partials of T=sum(tanh(x/2)), TY=sum(tanh(x/2)*y), L=sum(y)."""
    c = pl.program_id(0)              # core-split axis ("parallel")
    i = pl.program_id(1)              # reduction axis ("arbitrary")
    gblk = c * blocks_per_core + i    # global row-block index (may be phantom)

    @pl.when(i == 0)
    def _init():
        t_acc[...] = jnp.zeros_like(t_acc)
        ty_acc[...] = jnp.zeros_like(ty_acc)
        l_acc[...] = jnp.zeros_like(l_acc)

    def _accumulate(nrows):
        # nrows is a Python int -> static slice, no masks / iotas needed.
        x = logits_ref[:nrows, :].astype(jnp.float32)
        y = labels_ref[:nrows, :].astype(jnp.float32)
        t = jnp.tanh(0.5 * x)         # sigmoid(x) = 0.5*tanh(0.5*x) + 0.5 (affine folded out)
        t_acc[...] += jnp.sum(t, axis=0, keepdims=True)
        ty_acc[...] += jnp.sum(t * y, axis=0, keepdims=True)
        l_acc[...] += jnp.sum(y, axis=0, keepdims=True)

    rows_rem = rows - (num_blocks - 1) * row_tile   # rows in last real block (Python int)

    if rows_rem == row_tile:
        # All real blocks are full; only phantom (clamped) blocks are skipped.
        @pl.when(gblk < num_blocks)
        def _full():
            _accumulate(row_tile)
    else:
        @pl.when(gblk < num_blocks - 1)
        def _full():
            _accumulate(row_tile)

        @pl.when(gblk == num_blocks - 1)
        def _partial():
            _accumulate(rows_rem)

    @pl.when(i == blocks_per_core - 1)
    def _finalize():
        # One (1, 3, 128) lane-partial write per core; cross-lane reduction and
        # the scalar dice math happen in the (tiny) wrapper epilogue.
        out_ref[...] = jnp.concatenate(
            [t_acc[...], ty_acc[...], l_acc[...]], axis=0).reshape(1, 3, _LANE)


def _dice_partial_sums(lm, ym, rows):
    """Run the Pallas kernel over (rows, 128) views; returns scalar (T, TY, L)."""
    isz = lm.dtype.itemsize + ym.dtype.itemsize
    target_rows = max(_SUB, (_BLOCK_BYTES_BUDGET // (_LANE * isz)) // _SUB * _SUB)
    row_tile = min(target_rows, rows)
    num_blocks = pl.cdiv(rows, row_tile)

    # Split the row-block range across the two v7x TensorCores when there is
    # enough work; on 1-TC chips the extra axis just serializes.
    num_cores = 2 if num_blocks >= 2 else 1
    blocks_per_core = pl.cdiv(num_blocks, num_cores)
    has_phantom = num_cores * blocks_per_core > num_blocks

    def in_index_map(c, i):
        g = c * blocks_per_core + i
        if has_phantom:
            g = jnp.minimum(g, num_blocks - 1)   # phantom block: re-read last block (accum skipped)
        return (g, 0)

    block_in_bytes = row_tile * _LANE * isz       # both inputs, one pipeline buffer
    vmem_limit = int(min(64 << 20, max(32 << 20, 2 * block_in_bytes + (24 << 20))))

    kernel = functools.partial(
        _dice_partials_kernel,
        row_tile=row_tile, rows=rows,
        num_blocks=num_blocks, blocks_per_core=blocks_per_core)

    partials = pl.pallas_call(
        kernel,
        out_shape=jax.ShapeDtypeStruct((num_cores, 3, _LANE), jnp.float32),
        grid=(num_cores, blocks_per_core),
        in_specs=[
            pl.BlockSpec((row_tile, _LANE), in_index_map),
            pl.BlockSpec((row_tile, _LANE), in_index_map),
        ],
        out_specs=pl.BlockSpec((1, 3, _LANE), lambda c, i: (c, 0, 0)),
        scratch_shapes=[pltpu.VMEM((1, _LANE), jnp.float32)] * 3,
        compiler_params=pltpu.CompilerParams(
            dimension_semantics=("parallel", "arbitrary"),
            vmem_limit_bytes=vmem_limit),
    )(lm, ym)

    sums = jnp.sum(partials, axis=(0, 2))   # reduce cores + lanes -> (3,)
    return sums[0], sums[1], sums[2]


def dice_loss(logits, labels, smooth=1.0):
    """Pallas TPU implementation of DiceLoss.forward."""
    total = int(logits.size)
    lf = jnp.ravel(logits)
    yf = jnp.ravel(labels)

    n_main = (total // _LANE) * _LANE     # lane-aligned prefix handled by the kernel
    n_tail = total - n_main               # < 128 ragged elements handled in plain JAX

    inter = jnp.float32(0.0)
    psum = jnp.float32(0.0)
    lsum = jnp.float32(0.0)

    if n_main > 0:
        if n_tail == 0:
            lm, ym = lf, yf               # zero-copy reshape path (common case)
        else:
            # TODO(synk): XLA may materialize this prefix slice for misaligned
            # sizes; still cheaper than the old full jnp.pad and only hit when
            # total % 128 != 0.
            lm, ym = lf[:n_main], yf[:n_main]
        rows = n_main // _LANE
        t_sum, ty_sum, l_sum = _dice_partial_sums(
            lm.reshape(rows, _LANE), ym.reshape(rows, _LANE), rows)
        # Undo the folded sigmoid affine:  sigmoid(x) = 0.5*tanh(0.5*x) + 0.5
        inter = 0.5 * ty_sum + 0.5 * l_sum
        psum = 0.5 * t_sum + 0.5 * jnp.float32(n_main)
        lsum = l_sum

    if n_tail > 0:
        xt = lf[n_main:].astype(jnp.float32)
        yt = yf[n_main:].astype(jnp.float32)
        pt = jax.nn.sigmoid(xt)
        inter = inter + jnp.sum(pt * yt)
        psum = psum + jnp.sum(pt)
        lsum = lsum + jnp.sum(yt)

    # Note: f32 lane-partial accumulation drifts slightly vs a pairwise/f64
    # reference for billion-element inputs; acceptable for a loss value.
    dice = (2.0 * inter + float(smooth)) / (psum + lsum + float(smooth))
    return (1.0 - dice).astype(jnp.float32)


if __name__ == "__main__":
    key = jax.random.PRNGKey(0)
    k1, k2 = jax.random.split(key)

    # Small segmentation-style NCHW logits/labels.
    shape = (2, 4, 16, 16)
    logits = jax.random.normal(k1, shape, dtype=jnp.float32)
    labels = (jax.random.uniform(k2, shape) > 0.5).astype(jnp.float32)

    loss = jax.block_until_ready(dice_loss(logits, labels, smooth=1.0))

    # Pure-JAX reference (same math as the PyTorch module).
    preds_ref = jax.nn.sigmoid(logits).ravel()
    labels_ref = labels.ravel()
    inter_ref = jnp.sum(preds_ref * labels_ref)
    dice_ref = (2.0 * inter_ref + 1.0) / (jnp.sum(preds_ref) + jnp.sum(labels_ref) + 1.0)
    loss_ref = 1.0 - dice_ref

    assert jnp.allclose(loss, loss_ref, atol=1e-5, rtol=1e-5), (loss, loss_ref)
    print("KERNEL_OK")
</pallas_src>

<mosaic_0001>
module attributes {stable_mosaic.version = 11 : i64} {
  func.func @_dice_partials_kernel(%arg0: i32, %arg1: i32, %arg2: memref<16x128xf32, #tpu.memory_space<vmem>>, %arg3: memref<16x128xf32, #tpu.memory_space<vmem>>, %arg4: memref<1x3x128xf32, #tpu.memory_space<vmem>>, %arg5: memref<1x128xf32, #tpu.memory_space<vmem>>, %arg6: memref<1x128xf32, #tpu.memory_space<vmem>>, %arg7: memref<1x128xf32, #tpu.memory_space<vmem>>) attributes {dimension_semantics = [#tpu.dimension_semantics<parallel>, #tpu.dimension_semantics<arbitrary>], iteration_bounds = array<i64: 1, 1>, scalar_prefetch = 0 : i64, scratch_operands = 3 : i64, tpu.core_type = #tpu.core_type<tc>, window_params = [{transform_indices = @transform_0, window_bounds = array<i64: 16, 128>}, {transform_indices = @transform_1, window_bounds = array<i64: 16, 128>}, {transform_indices = @transform_2, window_bounds = array<i64: 1, 3, 128>}]} {
    %c1_i32 = arith.constant 1 : i32
    %0 = arith.muli %arg0, %c1_i32 : i32
    %1 = arith.addi %0, %arg1 : i32
    %c0_i32 = arith.constant 0 : i32
    %2 = arith.cmpi eq, %arg1, %c0_i32 : i32
    %3 = arith.extui %2 : i1 to i32
    %c0_i32_0 = arith.constant 0 : i32
    %4 = arith.cmpi ne, %3, %c0_i32_0 : i32
    scf.if %4 {
      %cst = arith.constant 0.000000e+00 : f32
      %11 = vector.broadcast %cst : f32 to vector<1x128xf32>
      %c0 = arith.constant 0 : index
      %c0_5 = arith.constant 0 : index
      %12 = vector.load %arg5[%c0, %c0_5] : memref<1x128xf32, #tpu.memory_space<vmem>>, vector<1x128xf32>
      tpu.vector_store %arg5[%c0, %c0_5], %11 {strides = array<i32>} : memref<1x128xf32, #tpu.memory_space<vmem>>, vector<1x128xf32>,
      %cst_6 = arith.constant 0.000000e+00 : f32
      %13 = vector.broadcast %cst_6 : f32 to vector<1x128xf32>
      %c0_7 = arith.constant 0 : index
      %c0_8 = arith.constant 0 : index
      %14 = vector.load %arg6[%c0_7, %c0_8] : memref<1x128xf32, #tpu.memory_space<vmem>>, vector<1x128xf32>
      tpu.vector_store %arg6[%c0_7, %c0_8], %13 {strides = array<i32>} : memref<1x128xf32, #tpu.memory_space<vmem>>, vector<1x128xf32>,
      %cst_9 = arith.constant 0.000000e+00 : f32
      %15 = vector.broadcast %cst_9 : f32 to vector<1x128xf32>
      %c0_10 = arith.constant 0 : index
      %c0_11 = arith.constant 0 : index
      %16 = vector.load %arg7[%c0_10, %c0_11] : memref<1x128xf32, #tpu.memory_space<vmem>>, vector<1x128xf32>
      tpu.vector_store %arg7[%c0_10, %c0_11], %15 {strides = array<i32>} : memref<1x128xf32, #tpu.memory_space<vmem>>, vector<1x128xf32>,
    } else {
    }
    %c1_i32_1 = arith.constant 1 : i32
    %5 = arith.cmpi slt, %1, %c1_i32_1 : i32
    %6 = arith.extui %5 : i1 to i32
    %c0_i32_2 = arith.constant 0 : i32
    %7 = arith.cmpi ne, %6, %c0_i32_2 : i32
    scf.if %7 {
      %c0 = arith.constant 0 : index
      %c0_5 = arith.constant 0 : index
      %11 = vector.load %arg2[%c0, %c0_5] : memref<16x128xf32, #tpu.memory_space<vmem>>, vector<16x128xf32>
      %c0_6 = arith.constant 0 : index
      %c0_7 = arith.constant 0 : index
      %12 = vector.load %arg3[%c0_6, %c0_7] : memref<16x128xf32, #tpu.memory_space<vmem>>, vector<16x128xf32>
      %cst = arith.constant 5.000000e-01 : f32
      %13 = vector.broadcast %cst : f32 to vector<16x128xf32>
      %14 = arith.mulf %13, %11 : vector<16x128xf32>
      %15 = math.tanh %14 : vector<16x128xf32>
      %c0_8 = arith.constant 0 : index
      %c0_9 = arith.constant 0 : index
      %16 = vector.load %arg5[%c0_8, %c0_9] : memref<1x128xf32, #tpu.memory_space<vmem>>, vector<1x128xf32>
      %cst_10 = arith.constant dense<0.000000e+00> : vector<128xf32>
      %17 = vector.multi_reduction <add>, %15, %cst_10 [0] : vector<16x128xf32> to vector<128xf32>
      %18 = vector.shape_cast %17 : vector<128xf32> to vector<1x128xf32>
      %19 = arith.addf %16, %18 : vector<1x128xf32>
      %c0_11 = arith.constant 0 : index
      %c0_12 = arith.constant 0 : index
      %20 = vector.load %arg5[%c0_11, %c0_12] : memref<1x128xf32, #tpu.memory_space<vmem>>, vector<1x128xf32>
      tpu.vector_store %arg5[%c0_11, %c0_12], %19 {strides = array<i32>} : memref<1x128xf32, #tpu.memory_space<vmem>>, vector<1x128xf32>,
      %c0_13 = arith.constant 0 : index
      %c0_14 = arith.constant 0 : index
      %21 = vector.load %arg6[%c0_13, %c0_14] : memref<1x128xf32, #tpu.memory_space<vmem>>, vector<1x128xf32>
      %22 = arith.mulf %15, %12 : vector<16x128xf32>
      %cst_15 = arith.constant dense<0.000000e+00> : vector<128xf32>
      %23 = vector.multi_reduction <add>, %22, %cst_15 [0] : vector<16x128xf32> to vector<128xf32>
      %24 = vector.shape_cast %23 : vector<128xf32> to vector<1x128xf32>
      %25 = arith.addf %21, %24 : vector<1x128xf32>
      %c0_16 = arith.constant 0 : index
      %c0_17 = arith.constant 0 : index
      %26 = vector.load %arg6[%c0_16, %c0_17] : memref<1x128xf32, #tpu.memory_space<vmem>>, vector<1x128xf32>
      tpu.vector_store %arg6[%c0_16, %c0_17], %25 {strides = array<i32>} : memref<1x128xf32, #tpu.memory_space<vmem>>, vector<1x128xf32>,
      %c0_18 = arith.constant 0 : index
      %c0_19 = arith.constant 0 : index
      %27 = vector.load %arg7[%c0_18, %c0_19] : memref<1x128xf32, #tpu.memory_space<vmem>>, vector<1x128xf32>
      %cst_20 = arith.constant dense<0.000000e+00> : vector<128xf32>
      %28 = vector.multi_reduction <add>, %12, %cst_20 [0] : vector<16x128xf32> to vector<128xf32>
      %29 = vector.shape_cast %28 : vector<128xf32> to vector<1x128xf32>
      %30 = arith.addf %27, %29 : vector<1x128xf32>
      %c0_21 = arith.constant 0 : index
      %c0_22 = arith.constant 0 : index
      %31 = vector.load %arg7[%c0_21, %c0_22] : memref<1x128xf32, #tpu.memory_space<vmem>>, vector<1x128xf32>
      tpu.vector_store %arg7[%c0_21, %c0_22], %30 {strides = array<i32>} : memref<1x128xf32, #tpu.memory_space<vmem>>, vector<1x128xf32>,
    } else {
    }
    %c0_i32_3 = arith.constant 0 : i32
    %8 = arith.cmpi eq, %arg1, %c0_i32_3 : i32
    %9 = arith.extui %8 : i1 to i32
    %c0_i32_4 = arith.constant 0 : i32
    %10 = arith.cmpi ne, %9, %c0_i32_4 : i32
    scf.if %10 {
      %c0 = arith.constant 0 : index
      %c0_5 = arith.constant 0 : index
      %11 = vector.load %arg5[%c0, %c0_5] : memref<1x128xf32, #tpu.memory_space<vmem>>, vector<1x128xf32>
      %c0_6 = arith.constant 0 : index
      %c0_7 = arith.constant 0 : index
      %12 = vector.load %arg6[%c0_6, %c0_7] : memref<1x128xf32, #tpu.memory_space<vmem>>, vector<1x128xf32>
      %c0_8 = arith.constant 0 : index
      %c0_9 = arith.constant 0 : index
      %13 = vector.load %arg7[%c0_8, %c0_9] : memref<1x128xf32, #tpu.memory_space<vmem>>, vector<1x128xf32>
      %14 = tpu.concatenate %11, %12, %13 in 0 : vector<1x128xf32>, vector<1x128xf32>, vector<1x128xf32> -> vector<3x128xf32>
      %15 = vector.shape_cast %14 : vector<3x128xf32> to vector<1x3x128xf32>
      %c0_10 = arith.constant 0 : index
      %c0_11 = arith.constant 0 : index
      %c0_12 = arith.constant 0 : index
      %16 = vector.load %arg4[%c0_10, %c0_11, %c0_12] : memref<1x3x128xf32, #tpu.memory_space<vmem>>, vector<1x3x128xf32>
      tpu.vector_store %arg4[%c0_10, %c0_11, %c0_12], %15 {strides = array<i32>} : memref<1x3x128xf32, #tpu.memory_space<vmem>>, vector<1x3x128xf32>,
    } else {
    }
    return
  }
  func.func @transform_0(%arg0: i32, %arg1: i32) -> (i32, i32) {
    %c1_i32 = arith.constant 1 : i32
    %0 = arith.muli %arg0, %c1_i32 : i32
    %1 = arith.addi %0, %arg1 : i32
    %c0_i32 = arith.constant 0 : i32
    %c0_i32_0 = arith.constant 0 : i32
    return %1, %c0_i32 : i32, i32
  }
  func.func @transform_1(%arg0: i32, %arg1: i32) -> (i32, i32) {
    %c1_i32 = arith.constant 1 : i32
    %0 = arith.muli %arg0, %c1_i32 : i32
    %1 = arith.addi %0, %arg1 : i32
    %c0_i32 = arith.constant 0 : i32
    %c0_i32_0 = arith.constant 0 : i32
    return %1, %c0_i32 : i32, i32
  }
  func.func @transform_2(%arg0: i32, %arg1: i32) -> (i32, i32, i32) {
    %c0_i32 = arith.constant 0 : i32
    %c0_i32_0 = arith.constant 0 : i32
    %c0_i32_1 = arith.constant 0 : i32
    return %arg0, %c0_i32, %c0_i32_0 : i32, i32, i32
  }
}

</mosaic_0001>

<llo_original>
// kernel: tpu_custom_call.1
$region0: #{tpu_custom_call.1}
  #allocation0 [shape = 'u32[]', space=smem, size = 0x4, offset = 0x4, fixed_abs, tag = 'smem constant byte address 0x4 - core index']
  #allocation1 [shape = 'u32[144,128]{1,0:T(1,128)}', space=vmem, size = 0x12000, scoped, tag = 'internal scratch']
  #allocation2 [shape = 'f32[1,128]{1,0:T(1,128)}', space=vmem, size = 0x200, scoped, tag = 'scratch operand']
  #allocation3 [shape = 'f32[1,128]{1,0:T(1,128)}', space=vmem, size = 0x200, scoped, tag = 'scratch operand']
  #allocation4 [shape = 'f32[1,128]{1,0:T(1,128)}', space=vmem, size = 0x200, scoped, tag = 'scratch operand']
  %s0 = inlined_call_operand.hbm [shape: f32[16,128], index: 0, kind: input, shape index: {}]
  %s1 = inlined_call_operand.hbm [shape: f32[16,128], index: 1, kind: input, shape index: {}]
  %s2 = inlined_call_operand.vmem [shape: f32[1,3,128], index: 2, kind: output, shape index: {}]
  %s3 = sld [smem:[#allocation0]]
  $region38: #{tpu_custom_call.1} parent=0
    _
  %s5 = ssub.s32 1, %s3
  %s6 = scalar_select 0, %s5, %s3
  $region1: #{tpu_custom_call.1} parent=0
    #allocation5 [shape = 'u8[8192]{0}', space=vmem, size = 0x2000, scoped, tag = 'input window, operand 0, single buffered']
    #allocation6 [shape = 's32[1]{0}', space=sflag, size = 0x4, scoped, tag = 'scoped memory for tpu_custom_call.1']
    #allocation7 [shape = 'u8[8192]{0}', space=vmem, size = 0x2000, scoped, tag = 'input window, operand 1, single buffered']
    #allocation8 [shape = 's32[1]{0}', space=sflag, size = 0x4, scoped, tag = 'scoped memory for tpu_custom_call.1']
    %7 = vsyncpa [#allocation6], 0
    %8 = vsyncpa [#allocation8], 0
    // Predicated region
    $region2: #{tpu_custom_call.1} parent=1 // pred_check
      _
    $region3: #{tpu_custom_call.1} parent=1 // pred_check_branch
      %10 = sbr.rel (0) target = $region5
    $region4: #{tpu_custom_call.1} parent=1 // pred_region
      %s11 = sadd.s32 0, 0
      %s12 = smul.u32 2, %s11
      %s14 = ssub.s32 256, 256
      %15 = vsyncadd [#allocation6], %s14
      %s16 = smul.addr %s12, 128
      %s17 = scalar_lea.hbm %s0, %s16
      %s18 = sshll.u32 [#allocation5], 4
      %s19 = int_to_ptr.vmem [resolvable:$true] %s18
      %24 = dma.hbm_to_vmem [thread:$0]  %s17, 256, %s19, [#allocation6], 128, 128, 8
    $region5: #{tpu_custom_call.1} parent=1 // pred_fallthru
      _
    // Predicated region
    $region6: #{tpu_custom_call.1} parent=1 // pred_check
      _
    $region7: #{tpu_custom_call.1} parent=1 // pred_check_branch
      %26 = sbr.rel (0) target = $region9
    $region8: #{tpu_custom_call.1} parent=1 // pred_region
      %s27 = sadd.s32 0, 0
      %s28 = smul.u32 2, %s27
      %s30 = ssub.s32 256, 256
      %31 = vsyncadd [#allocation8], %s30
      %s32 = smul.addr %s28, 128
      %s33 = scalar_lea.hbm %s1, %s32
      %s34 = sshll.u32 [#allocation7], 4
      %s35 = int_to_ptr.vmem [resolvable:$true] %s34
      %40 = dma.hbm_to_vmem [thread:$0]  %s33, 256, %s35, [#allocation8], 128, 128, 8
    $region9: #{tpu_custom_call.1} parent=1 // pred_fallthru
      _
    // Predicated region
    $region10: #{tpu_custom_call.1} parent=1 // pred_check
      _
    $region11: #{tpu_custom_call.1} parent=1 // pred_check_branch
      %42 = sbr.rel (0) target = $region13
    $region12: #{tpu_custom_call.1} parent=1 // pred_region
      %43 = dma.done [#allocation6], 256
    $region13: #{tpu_custom_call.1} parent=1 // pred_fallthru
      _
    // Predicated region
    $region14: #{tpu_custom_call.1} parent=1 // pred_check
      _
    $region15: #{tpu_custom_call.1} parent=1 // pred_check_branch
      %45 = sbr.rel (0) target = $region17
    $region16: #{tpu_custom_call.1} parent=1 // pred_region
      %46 = dma.done [#allocation8], 256
    $region17: #{tpu_custom_call.1} parent=1 // pred_fallthru
      _
    %s47 = sadd.s32 0, 0
    %s48 = smul.u32 2, %s47
    %s49 = sadd.s32 0, 0
    %s50 = smul.u32 2, %s49
    %s51 = sadd.s32 0, 0
    %p52 = scmp.eq.s32.totalorder 0, 0
    // Predicated region
    $region18: #{tpu_custom_call.1} parent=1 // pred_check
      %p53 = pneg %p52
    $region19: #{tpu_custom_call.1} parent=1 // pred_check_branch
      %55 = sbr.rel (%p53) target = $region21
    $region20: #{tpu_custom_call.1} parent=1 // pred_region
      %56 = vst [vmem:[#allocation2] sm:$0x1] 0.0
      %57 = vst [vmem:[#allocation3] sm:$0x1] 0.0
      %58 = vst [vmem:[#allocation4] sm:$0x1] 0.0
    $region21: #{tpu_custom_call.1} parent=1 // pred_fallthru
      _
    %p59 = scmp.lt.s32.totalorder %s51, 1
    // Predicated region
    $region22: #{tpu_custom_call.1} parent=1 // pred_check
      %p60 = pneg %p59
    $region23: #{tpu_custom_call.1} parent=1 // pred_check_branch
      %62 = sbr.rel (%p60) target = $region25
    $region24: #{tpu_custom_call.1} parent=1 // pred_region
      %v63 = vld [vmem:[#allocation5] sm:$0xff]
      %v64 = vld [vmem:[#allocation5 + $0x8] sm:$0xff]
      %v65 = vld [vmem:[#allocation7] sm:$0xff]
      %v66 = vld [vmem:[#allocation7 + $0x8] sm:$0xff]
      %v67 = vmul.f32 %v63, 0.5
      %v68 = vmul.f32 %v64, 0.5
      %v69 = vtanh.pop %v67
      %v70 = vtanh.pop %v68
      %v71 = vld [vmem:[#allocation2] sm:$0x1]
      %v72 = vadd.f32 %v69, %v70
      %v73 = vrot.slane %v72, 4
      %v74 = vadd.f32 %v72, %v73
      %v75 = vrot.slane %v74, 2
      %v76 = vadd.f32 %v74, %v75
      %v77 = vrot.slane %v76, 1
      %v78 = vadd.f32 %v76, %v77
      %v79 = vadd.f32 %v71, %v78
      %80 = vst [vmem:[#allocation2] sm:$0x1] %v79
      %v81 = vld [vmem:[#allocation3] sm:$0x1]
      %v82 = vmul.f32 %v69, %v65
      %v83 = vmul.f32 %v70, %v66
      %v84 = vadd.f32 %v82, %v83
      %v85 = vrot.slane %v84, 4
      %v86 = vadd.f32 %v84, %v85
      %v87 = vrot.slane %v86, 2
      %v88 = vadd.f32 %v86, %v87
      %v89 = vrot.slane %v88, 1
      %v90 = vadd.f32 %v88, %v89
      %v91 = vadd.f32 %v81, %v90
      %92 = vst [vmem:[#allocation3] sm:$0x1] %v91
      %v93 = vld [vmem:[#allocation4] sm:$0x1]
      %v94 = vadd.f32 %v65, %v66
      %v95 = vrot.slane %v94, 4
      %v96 = vadd.f32 %v94, %v95
      %v97 = vrot.slane %v96, 2
      %v98 = vadd.f32 %v96, %v97
      %v99 = vrot.slane %v98, 1
      %v100 = vadd.f32 %v98, %v99
      %v101 = vadd.f32 %v93, %v100
      %102 = vst [vmem:[#allocation4] sm:$0x1] %v101
    $region25: #{tpu_custom_call.1} parent=1 // pred_fallthru
      _
    // Predicated region
    $region26: #{tpu_custom_call.1} parent=1 // pred_check
      %p103 = pneg %p52
    $region27: #{tpu_custom_call.1} parent=1 // pred_check_branch
      %105 = sbr.rel (%p103) target = $region29
    $region28: #{tpu_custom_call.1} parent=1 // pred_region
      %v106 = vld [vmem:[#allocation2] sm:$0x1]
      %v107 = vld [vmem:[#allocation3] sm:$0x1]
      %v108 = vld [vmem:[#allocation4] sm:$0x1]
      %v110 = vlaneseq
      %v111 = vshrl.u32 %v110, 7
      %v112 = vsub.s32 0, %v111
      %v113 = vrot.slane %v107, %v112
      %v116 = vlaneseq
      %v117 = vshrl.u32 %v116, 7
      %v118 = vsub.s32 0, %v117
      %v119 = vrot.slane %v108, %v118
      %vm121 = vcmask 1040384
      %v122 = vsel %vm121, %v106, %v113
      %vm123 = vcmask 1041408
      %v124 = vsel %vm123, %v122, %v119
      %125 = vst [vmem:[%s2] sm:$0x7] %v124
    $region29: #{tpu_custom_call.1} parent=1 // pred_fallthru
      _
    // Predicated region
    $region30: #{tpu_custom_call.1} parent=1 // pred_check
      _
    $region31: #{tpu_custom_call.1} parent=1 // pred_check_branch
      %127 = sbr.rel (0) target = $region33
    $region32: #{tpu_custom_call.1} parent=1 // pred_region
      _
    $region33: #{tpu_custom_call.1} parent=1 // pred_fallthru
      _
    // Predicated region
    $region34: #{tpu_custom_call.1} parent=1 // pred_check
      _
    $region35: #{tpu_custom_call.1} parent=1 // pred_check_branch
      %129 = sbr.rel (0) target = $region37
    $region36: #{tpu_custom_call.1} parent=1 // pred_region
      _
    $region37: #{tpu_custom_call.1} parent=1 // pred_fallthru
      _
    %130 = vsyncpa [#allocation6], 1
    %131 = vsyncpa [#allocation8], 1

</llo_original>
